<compile_context>
chip_gen: v7x
topology: tpu7x:2x2x1
jax: 0.10.0
libtpu: 0.0.40
codegen_flags: <defaults>
</compile_context>

<pallas_src>
import jax
import jax.numpy as jnp
from jax.experimental import pallas as pl
from jax.experimental.pallas import tpu as pltpu


def _round_up(n, m):
    return (n + m - 1) // m * m


def fc_softmax_kernel(x_ref, w_ref, b_ref, o_ref):
    # x_ref: (bt, F) native dtype ; w_ref: (F, Cp) bf16 (pre-transposed) ;
    # b_ref: (1, Cp) f32 ; o_ref: (bt, Cp)
    x = x_ref[...].astype(jnp.bfloat16)                    # in-kernel cast (VPU)
    logits = jnp.dot(x, w_ref[...],                        # MKxKN on the MXU
                     preferred_element_type=jnp.float32) + b_ref[...]
    m = jnp.max(logits, axis=-1, keepdims=True)            # stable softmax (XLU)
    e = jnp.exp(logits - m)                                # EUP; padded cols -> exactly 0
    denom = jnp.sum(e, axis=-1, keepdims=True)             # XLU
    # per-row divide on the EUP slot; VPU only does the broadcast multiply
    o_ref[...] = (e * pl.reciprocal(denom, approx=True)).astype(o_ref.dtype)


def prepare_params(weight, bias):
    """One-time (param-load-time) prep: bf16 cast + transpose + lane padding.

    weight: (C, F) PyTorch nn.Linear layout.  bias: (C,).
    Returns w_p (F, Cp) bf16, b_p (1, Cp) f32, num_classes.
    Padded weight columns are zero; padded bias entries are -1e30 (kept in f32)
    so padded classes contribute exp()==0 to the softmax.
    """
    C, F = weight.shape
    Cp = _round_up(C, 128)
    w_t = jnp.asarray(weight, jnp.float32).T.astype(jnp.bfloat16)   # (F, C)
    w_p = jnp.pad(w_t, ((0, 0), (0, Cp - C)))                       # (F, Cp)
    b_p = jnp.pad(jnp.asarray(bias, jnp.float32), (0, Cp - C),
                  constant_values=-1e30).reshape(1, Cp)
    return w_p, b_p, C


def googlenet_top_apply(x, w_p, b_p, *, out_dtype=jnp.float32):
    """x: (B, F) float ; w_p: (F, Cp) bf16 ; b_p: (1, Cp) f32.

    Returns the PADDED (Bp, Cp) probabilities: columns [C:Cp] are exactly 0 and
    rows [B:Bp] are throwaway, so consumers (argmax / top-k / loss) can use the
    padded tensor directly and skip the slice copy.
    """
    B, F = x.shape
    Fw, Cp = w_p.shape
    assert F == Fw, (F, Fw)

    # bf16-packing-friendly batch padding and tile choice.
    Bp = _round_up(B, 16)
    if Bp <= 256:
        bt = max(16, _round_up(Bp // 2, 16))   # >=2 grid steps when possible (v7x 2nd TC)
    elif Bp <= 2048:
        bt = 256
    else:
        bt = 512
    Bp = _round_up(Bp, bt)
    if Bp != B:                                # pad only when actually misaligned
        x = jnp.pad(x, ((0, Bp - B), (0, 0)))  # no dtype cast here (cast is in-kernel)

    def build(single_buffer_resident):
        if single_buffer_resident:
            w_spec = pl.BlockSpec((F, Cp), lambda i: (0, 0),
                                  pipeline_mode=pl.Buffered(1))
            b_spec = pl.BlockSpec((1, Cp), lambda i: (0, 0),
                                  pipeline_mode=pl.Buffered(1))
        else:
            w_spec = pl.BlockSpec((F, Cp), lambda i: (0, 0))
            b_spec = pl.BlockSpec((1, Cp), lambda i: (0, 0))
        return pl.pallas_call(
            fc_softmax_kernel,
            out_shape=jax.ShapeDtypeStruct((Bp, Cp), out_dtype),
            grid=(Bp // bt,),
            in_specs=[
                pl.BlockSpec((bt, F), lambda i: (i, 0)),   # activations: pipelined per tile
                w_spec,                                    # weight: VMEM-resident
                b_spec,                                    # bias:   VMEM-resident
            ],
            out_specs=pl.BlockSpec((bt, Cp), lambda i: (i, 0)),
            compiler_params=pltpu.CompilerParams(
                dimension_semantics=("parallel",),         # shard batch across TCs on v7x
                vmem_limit_bytes=32 * 1024 * 1024,         # headroom for 256/512-row tiles
            ),
        )

    try:
        return build(True)(x, w_p, b_p)
    except Exception:
        # Fallback if this jax version does not accept pipeline_mode on
        # pallas_call BlockSpecs; only cost is one extra resident-weight buffer.
        return build(False)(x, w_p, b_p)


def googlenet_top(x, weight, bias):
    """Module-equivalent convenience wrapper: returns (B, num_classes).

    Perf-sensitive callers should call prepare_params() once at load time, use
    googlenet_top_apply(), and consume the padded output directly.
    """
    w_p, b_p, C = prepare_params(weight, bias)
    return googlenet_top_apply(x, w_p, b_p)[:x.shape[0], :C]


if __name__ == "__main__":
    # Small shapes consistent with the module (real GoogLeNet fc is 1024 -> 1000):
    # batch=4, in_features=64, num_classes=32.
    B, F, C = 4, 64, 32

    key = jax.random.PRNGKey(0)
    kx, kw, kb = jax.random.split(key, 3)
    x = jax.random.normal(kx, (B, F), dtype=jnp.float32)
    weight = jax.random.normal(kw, (C, F), dtype=jnp.float32) * 0.05  # PyTorch (C, F) layout
    bias = jax.random.normal(kb, (C,), dtype=jnp.float32) * 0.01

    w_p, b_p, num_classes = prepare_params(weight, bias)
    out_padded = googlenet_top_apply(x, w_p, b_p)          # padded (Bp, Cp) result
    out_padded = jax.block_until_ready(out_padded)
    out = out_padded[:B, :num_classes]                     # slice only for the check

    # Reference with the same bf16 operand rounding (f32 accumulate), plain JAX.
    xr = x.astype(jnp.bfloat16).astype(jnp.float32)
    wr = weight.astype(jnp.bfloat16).astype(jnp.float32)
    ref = jax.nn.softmax(xr @ wr.T + bias, axis=-1)

    assert out.shape == (B, C)
    # Padded classes must be exactly zero so the padded tensor is safe to consume.
    assert float(jnp.max(jnp.abs(out_padded[:B, num_classes:]))) == 0.0
    assert jnp.allclose(out, ref, atol=2e-3, rtol=0), float(jnp.max(jnp.abs(out - ref)))

    print("KERNEL_OK")
</pallas_src>

<mosaic_0001>
module attributes {stable_mosaic.version = 11 : i64} {
  func.func @fc_softmax_kernel(%arg0: i32, %arg1: memref<16x64xf32, #tpu.memory_space<vmem>>, %arg2: memref<64x128xbf16, #tpu.memory_space<vmem>>, %arg3: memref<1x128xf32, #tpu.memory_space<vmem>>, %arg4: memref<16x128xf32, #tpu.memory_space<vmem>>) attributes {dimension_semantics = [#tpu.dimension_semantics<parallel>], iteration_bounds = array<i64: 1>, scalar_prefetch = 0 : i64, scratch_operands = 0 : i64, tpu.core_type = #tpu.core_type<tc>, window_params = [{transform_indices = @transform_0, window_bounds = array<i64: 16, 64>}, {pipeline_mode = #tpu.pipeline_mode<synchronous>, transform_indices = @transform_1, window_bounds = array<i64: 64, 128>}, {pipeline_mode = #tpu.pipeline_mode<synchronous>, transform_indices = @transform_2, window_bounds = array<i64: 1, 128>}, {transform_indices = @transform_3, window_bounds = array<i64: 16, 128>}]} {
    %c0 = arith.constant 0 : index
    %c0_0 = arith.constant 0 : index
    %0 = vector.load %arg1[%c0, %c0_0] : memref<16x64xf32, #tpu.memory_space<vmem>>, vector<16x64xf32>
    %1 = arith.truncf %0 : vector<16x64xf32> to vector<16x64xbf16>
    %c0_1 = arith.constant 0 : index
    %c0_2 = arith.constant 0 : index
    %2 = vector.load %arg2[%c0_1, %c0_2] : memref<64x128xbf16, #tpu.memory_space<vmem>>, vector<64x128xbf16>
    %cst = arith.constant dense<0.000000e+00> : vector<16x128xf32>
    %3 = tpu.matmul %1, %2, %cst {dimension_numbers = #tpu.dot_dimension_numbers<[1], [0], [0], [1], [0, 0, 1, 1], [], []>} : vector<16x64xbf16>, vector<64x128xbf16>, vector<16x128xf32> -> vector<16x128xf32>
    %c0_3 = arith.constant 0 : index
    %c0_4 = arith.constant 0 : index
    %4 = vector.load %arg3[%c0_3, %c0_4] : memref<1x128xf32, #tpu.memory_space<vmem>>, vector<1x128xf32>
    %5 = vector.broadcast %4 : vector<1x128xf32> to vector<16x128xf32>
    %6 = arith.addf %3, %5 : vector<16x128xf32>
    %cst_5 = arith.constant dense<0xFF800000> : vector<16xf32>
    %7 = vector.multi_reduction <maximumf>, %6, %cst_5 [1] : vector<16x128xf32> to vector<16xf32>
    %8 = vector.shape_cast %7 : vector<16xf32> to vector<16x1xf32>
    %9 = vector.broadcast %8 : vector<16x1xf32> to vector<16x128xf32>
    %10 = arith.subf %6, %9 : vector<16x128xf32>
    %11 = math.exp %10 : vector<16x128xf32>
    %cst_6 = arith.constant dense<0.000000e+00> : vector<16xf32>
    %12 = vector.multi_reduction <add>, %11, %cst_6 [1] : vector<16x128xf32> to vector<16xf32>
    %13 = vector.shape_cast %12 : vector<16xf32> to vector<16x1xf32>
    %14 = tpu.reciprocal %13 {approx = true} : vector<16x1xf32> -> vector<16x1xf32>
    %15 = vector.broadcast %14 : vector<16x1xf32> to vector<16x128xf32>
    %16 = arith.mulf %11, %15 : vector<16x128xf32>
    %c0_7 = arith.constant 0 : index
    %c0_8 = arith.constant 0 : index
    %17 = vector.load %arg4[%c0_7, %c0_8] : memref<16x128xf32, #tpu.memory_space<vmem>>, vector<16x128xf32>
    tpu.vector_store %arg4[%c0_7, %c0_8], %16 {strides = array<i32>} : memref<16x128xf32, #tpu.memory_space<vmem>>, vector<16x128xf32>,
    return
  }
  func.func @transform_0(%arg0: i32) -> (i32, i32) {
    %c0_i32 = arith.constant 0 : i32
    %c0_i32_0 = arith.constant 0 : i32
    return %arg0, %c0_i32 : i32, i32
  }
  func.func @transform_1(%arg0: i32) -> (i32, i32) {
    %c0_i32 = arith.constant 0 : i32
    %c0_i32_0 = arith.constant 0 : i32
    %c0_i32_1 = arith.constant 0 : i32
    return %c0_i32, %c0_i32_0 : i32, i32
  }
  func.func @transform_2(%arg0: i32) -> (i32, i32) {
    %c0_i32 = arith.constant 0 : i32
    %c0_i32_0 = arith.constant 0 : i32
    %c0_i32_1 = arith.constant 0 : i32
    return %c0_i32, %c0_i32_0 : i32, i32
  }
  func.func @transform_3(%arg0: i32) -> (i32, i32) {
    %c0_i32 = arith.constant 0 : i32
    %c0_i32_0 = arith.constant 0 : i32
    return %arg0, %c0_i32 : i32, i32
  }
}

module attributes {stable_mosaic.version = 11 : i64} {
  func.func @fc_softmax_kernel(%arg0: i32, %arg1: memref<16x64xf32, #tpu.memory_space<vmem>>, %arg2: memref<64x128xbf16, #tpu.memory_space<vmem>>, %arg3: memref<1x128xf32, #tpu.memory_space<vmem>>, %arg4: memref<16x128xf32, #tpu.memory_space<vmem>>) attributes {dimension_semantics = [#tpu.dimension_semantics<parallel>], iteration_bounds = array<i64: 1>, scalar_prefetch = 0 : i64, scratch_operands = 0 : i64, tpu.core_type = #tpu.core_type<tc>, window_params = [{transform_indices = @transform_0, window_bounds = array<i64: 16, 64>}, {pipeline_mode = #tpu.pipeline_mode<synchronous>, transform_indices = @transform_1, window_bounds = array<i64: 64, 128>}, {pipeline_mode = #tpu.pipeline_mode<synchronous>, transform_indices = @transform_2, window_bounds = array<i64: 1, 128>}, {transform_indices = @transform_3, window_bounds = array<i64: 16, 128>}]} {
    %c0 = arith.constant 0 : index
    %c0_0 = arith.constant 0 : index
    %0 = vector.load %arg1[%c0, %c0_0] : memref<16x64xf32, #tpu.memory_space<vmem>>, vector<16x64xf32>
    %1 = arith.truncf %0 : vector<16x64xf32> to vector<16x64xbf16>
    %c0_1 = arith.constant 0 : index
    %c0_2 = arith.constant 0 : index
    %2 = vector.load %arg2[%c0_1, %c0_2] : memref<64x128xbf16, #tpu.memory_space<vmem>>, vector<64x128xbf16>
    %cst = arith.constant dense<0.000000e+00> : vector<16x128xf32>
    %3 = tpu.matmul %1, %2, %cst {dimension_numbers = #tpu.dot_dimension_numbers<[1], [0], [0], [1], [0, 0, 1, 1], [], []>} : vector<16x64xbf16>, vector<64x128xbf16>, vector<16x128xf32> -> vector<16x128xf32>
    %c0_3 = arith.constant 0 : index
    %c0_4 = arith.constant 0 : index
    %4 = vector.load %arg3[%c0_3, %c0_4] : memref<1x128xf32, #tpu.memory_space<vmem>>, vector<1x128xf32>
    %5 = vector.broadcast %4 : vector<1x128xf32> to vector<16x128xf32>
    %6 = arith.addf %3, %5 : vector<16x128xf32>
    %cst_5 = arith.constant dense<0xFF800000> : vector<16xf32>
    %7 = vector.multi_reduction <maximumf>, %6, %cst_5 [1] : vector<16x128xf32> to vector<16xf32>
    %8 = vector.shape_cast %7 : vector<16xf32> to vector<16x1xf32>
    %9 = vector.broadcast %8 : vector<16x1xf32> to vector<16x128xf32>
    %10 = arith.subf %6, %9 : vector<16x128xf32>
    %11 = math.exp %10 : vector<16x128xf32>
    %cst_6 = arith.constant dense<0.000000e+00> : vector<16xf32>
    %12 = vector.multi_reduction <add>, %11, %cst_6 [1] : vector<16x128xf32> to vector<16xf32>
    %13 = vector.shape_cast %12 : vector<16xf32> to vector<16x1xf32>
    %14 = tpu.reciprocal %13 {approx = true} : vector<16x1xf32> -> vector<16x1xf32>
    %15 = vector.broadcast %14 : vector<16x1xf32> to vector<16x128xf32>
    %16 = arith.mulf %11, %15 : vector<16x128xf32>
    %c0_7 = arith.constant 0 : index
    %c0_8 = arith.constant 0 : index
    %17 = vector.load %arg4[%c0_7, %c0_8] : memref<16x128xf32, #tpu.memory_space<vmem>>, vector<16x128xf32>
    tpu.vector_store %arg4[%c0_7, %c0_8], %16 {strides = array<i32>} : memref<16x128xf32, #tpu.memory_space<vmem>>, vector<16x128xf32>,
    return
  }
  func.func @transform_0(%arg0: i32) -> (i32, i32) {
    %c0_i32 = arith.constant 0 : i32
    %c0_i32_0 = arith.constant 0 : i32
    return %arg0, %c0_i32 : i32, i32
  }
  func.func @transform_1(%arg0: i32) -> (i32, i32) {
    %c0_i32 = arith.constant 0 : i32
    %c0_i32_0 = arith.constant 0 : i32
    %c0_i32_1 = arith.constant 0 : i32
    return %c0_i32, %c0_i32_0 : i32, i32
  }
  func.func @transform_2(%arg0: i32) -> (i32, i32) {
    %c0_i32 = arith.constant 0 : i32
    %c0_i32_0 = arith.constant 0 : i32
    %c0_i32_1 = arith.constant 0 : i32
    return %c0_i32, %c0_i32_0 : i32, i32
  }
  func.func @transform_3(%arg0: i32) -> (i32, i32) {
    %c0_i32 = arith.constant 0 : i32
    %c0_i32_0 = arith.constant 0 : i32
    return %arg0, %c0_i32 : i32, i32
  }
}

</mosaic_0001>

<llo_original>
// kernel: tpu_custom_call.1
$region0: #{tpu_custom_call.1}
  #allocation0 [shape = 'u32[]', space=smem, size = 0x4, offset = 0x4, fixed_abs, tag = 'smem constant byte address 0x4 - core index']
  #allocation1 [shape = 'u32[144,128]{1,0:T(1,128)}', space=vmem, size = 0x12000, scoped, tag = 'internal scratch']
  %s0 = inlined_call_operand.hbm [shape: f32[16,64], index: 0, kind: input, shape index: {}]
  %s1 = inlined_call_operand.hbm [shape: bf16[64,128], index: 1, kind: input, shape index: {}]
  %s2 = inlined_call_operand.vmem [shape: f32[1,128], index: 2, kind: input, shape index: {}]
  %s3 = inlined_call_operand.hbm [shape: f32[16,128], index: 3, kind: output, shape index: {}]
  %s4 = sld [smem:[#allocation0]]
  $region30: #{tpu_custom_call.1} parent=0
    _
  %s6 = ssub.s32 1, %s4
  %s7 = scalar_select 0, %s6, %s4
  $region1: #{tpu_custom_call.1} parent=0
    #allocation2 [shape = 'u8[8192]{0}', space=vmem, size = 0x2000, scoped, tag = 'input window, operand 0, single buffered']
    #allocation3 [shape = 's32[1]{0}', space=sflag, size = 0x4, scoped, tag = 'scoped memory for tpu_custom_call.1']
    #allocation4 [shape = 's32[1]{0}', space=sflag, size = 0x4, scoped, tag = 'scoped memory for tpu_custom_call.1']
    #allocation5 [shape = 'u8[16384]{0}', space=vmem, size = 0x4000, scoped, tag = 'input window, operand 1, single buffered']
    #allocation6 [shape = 's32[1]{0}', space=sflag, size = 0x4, scoped, tag = 'scoped memory for tpu_custom_call.1']
    #allocation7 [shape = 'u8[8192]{0}', space=vmem, size = 0x2000, scoped, tag = 'output window, operand 0, single buffered']
    %8 = vsyncpa [#allocation3], 0
    %9 = vsyncpa [#allocation6], 0
    %10 = vsyncpa [#allocation4], 0
    // Predicated region
    $region2: #{tpu_custom_call.1} parent=1 // pred_check
      _
    $region3: #{tpu_custom_call.1} parent=1 // pred_check_branch
      %12 = sbr.rel (0) target = $region5
    $region4: #{tpu_custom_call.1} parent=1 // pred_region
      %s14 = ssub.s32 256, 256
      %15 = vsyncadd [#allocation3], %s14
      %s16 = sshll.u32 [#allocation2], 4
      %s17 = int_to_ptr.vmem [resolvable:$true] %s16
      %22 = dma.hbm_to_vmem [thread:$0]  %s0, 256, %s17, [#allocation3], 128, 128, 8
    $region5: #{tpu_custom_call.1} parent=1 // pred_fallthru
      _
    // Predicated region
    $region6: #{tpu_custom_call.1} parent=1 // pred_check
      _
    $region7: #{tpu_custom_call.1} parent=1 // pred_check_branch
      %24 = sbr.rel (0) target = $region9
    $region8: #{tpu_custom_call.1} parent=1 // pred_region
      %s26 = ssub.s32 512, 512
      %27 = vsyncadd [#allocation6], %s26
      %s28 = sshll.u32 [#allocation5], 4
      %s29 = int_to_ptr.vmem [resolvable:$true] %s28
      %34 = dma.hbm_to_vmem [thread:$0]  %s1, 512, %s29, [#allocation6], 64, 64, 4
    $region9: #{tpu_custom_call.1} parent=1 // pred_fallthru
      _
    // Predicated region
    $region10: #{tpu_custom_call.1} parent=1 // pred_check
      _
    $region11: #{tpu_custom_call.1} parent=1 // pred_check_branch
      %36 = sbr.rel (0) target = $region13
    $region12: #{tpu_custom_call.1} parent=1 // pred_region
      _
    $region13: #{tpu_custom_call.1} parent=1 // pred_fallthru
      _
    // Predicated region
    $region14: #{tpu_custom_call.1} parent=1 // pred_check
      _
    $region15: #{tpu_custom_call.1} parent=1 // pred_check_branch
      %38 = sbr.rel (0) target = $region17
    $region16: #{tpu_custom_call.1} parent=1 // pred_region
      %39 = dma.done [#allocation3], 256
    $region17: #{tpu_custom_call.1} parent=1 // pred_fallthru
      _
    // Predicated region
    $region18: #{tpu_custom_call.1} parent=1 // pred_check
      _
    $region19: #{tpu_custom_call.1} parent=1 // pred_check_branch
      %41 = sbr.rel (0) target = $region21
    $region20: #{tpu_custom_call.1} parent=1 // pred_region
      %42 = dma.done [#allocation6], 512
    $region21: #{tpu_custom_call.1} parent=1 // pred_fallthru
      _
    %v44 = vld [vmem:[#allocation2] sm:$0xff]
    %v45 = vld [vmem:[#allocation2 + $0x8] sm:$0xff]
    %v46 = vpack.c.bf16 %v45, %v44
    %v47 = vld [vmem:[#allocation5] sm:$0xf]
    %v48 = vld [vmem:[#allocation5 + $0x4] sm:$0xf]
    %v49 = vld [vmem:[#allocation5 + $0x8] sm:$0xf]
    %v50 = vld [vmem:[#allocation5 + $0xc] sm:$0xf]
    %v51 = vld [vmem:[#allocation5 + $0x10] sm:$0xf]
    %v52 = vld [vmem:[#allocation5 + $0x14] sm:$0xf]
    %v53 = vld [vmem:[#allocation5 + $0x18] sm:$0xf]
    %v54 = vld [vmem:[#allocation5 + $0x1c] sm:$0xf]
    %v55 = vld [vmem:[%s2] sm:$0x1]
    %v57 = vlaneseq
    %v58 = vshrl.u32 %v57, 7
    %v59 = vsub.s32 0, %v58
    %v60 = vrot.slane %v55, %v59
    %v70 = vunpack.c.l.b16 %v47
    %v71 = vunpack.c.l.b16 %v48
    %v72 = vunpack.c.l.b16 %v49
    %v73 = vunpack.c.l.b16 %v50
    %v74 = vunpack.c.l.b16 %v51
    %v75 = vunpack.c.l.b16 %v52
    %v76 = vunpack.c.l.b16 %v53
    %v77 = vunpack.c.l.b16 %v54
    %v78 = vpack.c.b16 %v71, %v70
    %v79 = vpack.c.b16 %v73, %v72
    %v80 = vpack.c.b16 %v75, %v74
    %v81 = vpack.c.b16 %v77, %v76
    %vm86 = vcmask 523264
    %v88 = vsel %vm86, %v46, 0
    %90 = vmatprep.subr.bf16.mxu0 0
    %91 = vmatpush1.bf16.msra.mxu0 %v78
    %92 = vmatprep.subr.bf16.mxu0 0
    %93 = vmatpush1.bf16.msra.mxu0 %v79
    %94 = vmatprep.subr.bf16.mxu0 0
    %95 = vmatpush1.bf16.msra.mxu0 %v80
    %96 = vmatprep.subr.bf16.mxu0 0
    %97 = vmatpush1.bf16.msra.mxu0 %v81
    %98 = vmatprep.subr.bf16.mxu0 0
    %99 = vmatpush1.bf16.msra.mxu0 0
    %100 = vmatprep.subr.bf16.mxu0 0
    %101 = vmatpush1.bf16.msra.mxu0 0
    %102 = vmatprep.subr.bf16.mxu0 0
    %103 = vmatpush1.bf16.msra.mxu0 0
    %104 = vmatprep.subr.bf16.mxu0 0
    %105 = vmatpush1.bf16.msra.mxu0 0
    %106 = vmatprep.subr.bf16.mxu0 0
    %107 = vmatpush1.bf16.msra.mxu0 0
    %108 = vmatprep.subr.bf16.mxu0 0
    %109 = vmatpush1.bf16.msra.mxu0 0
    %110 = vmatprep.subr.bf16.mxu0 0
    %111 = vmatpush1.bf16.msra.mxu0 0
    %112 = vmatprep.subr.bf16.mxu0 0
    %113 = vmatpush1.bf16.msra.mxu0 0
    %114 = vmatprep.subr.bf16.mxu0 0
    %115 = vmatpush1.bf16.msra.mxu0 0
    %116 = vmatprep.subr.bf16.mxu0 0
    %117 = vmatpush1.bf16.msra.mxu0 0
    %118 = vmatprep.subr.bf16.mxu0 0
    %119 = vmatpush1.bf16.msra.mxu0 0
    %120 = vmatprep.subr.bf16.mxu0 0
    %121 = vmatpush1.bf16.msra.mxu0 0
    %122 = vmatprep.mubr.bf16.mxu0 0
    %123 = vmatmul.mubr.bf16.gmra.mrb[0].mxu0 %v88
    %v124 = vpop.f32.mrb[0].mxu0
    %v125 = vadd.f32 %v60, %v124
    %v126 = vpop.f32.mrb[0].mxu0
    %v127 = vpop.f32.mrb[0].mxu0
    %v128 = vadd.f32 %v60, %v127
    %v129 = vpop.f32.mrb[0].mxu0
    %130 = vdwg.mxu0
    %131 = vmax.xlane.f32.xlu0 %v125
    %v132 = vpop.xlane.xlu0 %131
    %133 = vmax.xlane.f32.xlu0 %v128
    %v134 = vpop.xlane.xlu0 %133
    %v135 = vsub.f32 %v125, %v132
    %v136 = vsub.f32 %v128, %v134
    %v137 = vmul.f32 %v135, 1.442695
    %v138 = vpow.pop %v137
    %v139 = vmul.f32 %v136, 1.442695
    %v140 = vpow.pop %v139
    %141 = vadd.xlane.f32.xlu0 %v138
    %v142 = vpop.xlane.xlu0 %141
    %143 = vadd.xlane.f32.xlu0 %v140
    %v144 = vpop.xlane.xlu0 %143
    %v145 = vrcp.pop %v142
    %v146 = vrcp.pop %v144
    %v147 = vmul.f32 %v138, %v145
    %v148 = vmul.f32 %v140, %v146
    %149 = vst [vmem:[#allocation7] sm:$0xff] %v147
    %150 = vst [vmem:[#allocation7 + $0x8] sm:$0xff] %v148
    // Predicated region
    $region22: #{tpu_custom_call.1} parent=1 // pred_check
      _
    $region23: #{tpu_custom_call.1} parent=1 // pred_check_branch
      %152 = sbr.rel (0) target = $region25
    $region24: #{tpu_custom_call.1} parent=1 // pred_region
      %s154 = ssub.s32 256, 256
      %155 = vsyncadd [#allocation4], %s154
      %s156 = sshll.u32 [#allocation7], 4
      %s157 = int_to_ptr.vmem [resolvable:$true] %s156
      %162 = dma.vmem_to_hbm [thread:$0]  %s157, 256, %s3, [#allocation4], 128, 128, 8
    $region25: #{tpu_custom_call.1} parent=1 // pred_fallthru
      _
    // Predicated region
    $region26: #{tpu_custom_call.1} parent=1 // pred_check
      _
    $region27: #{tpu_custom_call.1} parent=1 // pred_check_branch
      %164 = sbr.rel (0) target = $region29
    $region28: #{tpu_custom_call.1} parent=1 // pred_region
      %165 = dma.done [#allocation4], 256
    $region29: #{tpu_custom_call.1} parent=1 // pred_fallthru
      _
    %166 = vsyncpa [#allocation3], 1
    %167 = vsyncpa [#allocation6], 1
    %168 = vsyncpa [#allocation4], 1

// kernel: tpu_custom_call.1
$region0: #{tpu_custom_call.1}
  #allocation0 [shape = 'u32[]', space=smem, size = 0x4, offset = 0x4, fixed_abs, tag = 'smem constant byte address 0x4 - core index']
  #allocation1 [shape = 'u32[144,128]{1,0:T(1,128)}', space=vmem, size = 0x12000, scoped, tag = 'internal scratch']
  %s0 = inlined_call_operand.hbm [shape: f32[16,64], index: 0, kind: input, shape index: {}]
  %s1 = inlined_call_operand.hbm [shape: bf16[64,128], index: 1, kind: input, shape index: {}]
  %s2 = inlined_call_operand.vmem [shape: f32[1,128], index: 2, kind: input, shape index: {}]
  %s3 = inlined_call_operand.hbm [shape: f32[16,128], index: 3, kind: output, shape index: {}]
  %s4 = sld [smem:[#allocation0]]
  $region30: #{tpu_custom_call.1} parent=0
    _
  %s6 = ssub.s32 1, %s4
  %s7 = scalar_select 0, %s6, %s4
  $region1: #{tpu_custom_call.1} parent=0
    #allocation2 [shape = 'u8[8192]{0}', space=vmem, size = 0x2000, scoped, tag = 'input window, operand 0, single buffered']
    #allocation3 [shape = 's32[1]{0}', space=sflag, size = 0x4, scoped, tag = 'scoped memory for tpu_custom_call.1']
    #allocation4 [shape = 's32[1]{0}', space=sflag, size = 0x4, scoped, tag = 'scoped memory for tpu_custom_call.1']
    #allocation5 [shape = 'u8[16384]{0}', space=vmem, size = 0x4000, scoped, tag = 'input window, operand 1, single buffered']
    #allocation6 [shape = 's32[1]{0}', space=sflag, size = 0x4, scoped, tag = 'scoped memory for tpu_custom_call.1']
    #allocation7 [shape = 'u8[8192]{0}', space=vmem, size = 0x2000, scoped, tag = 'output window, operand 0, single buffered']
    %8 = vsyncpa [#allocation3], 0
    %9 = vsyncpa [#allocation6], 0
    %10 = vsyncpa [#allocation4], 0
    // Predicated region
    $region2: #{tpu_custom_call.1} parent=1 // pred_check
      _
    $region3: #{tpu_custom_call.1} parent=1 // pred_check_branch
      %12 = sbr.rel (0) target = $region5
    $region4: #{tpu_custom_call.1} parent=1 // pred_region
      %s14 = ssub.s32 256, 256
      %15 = vsyncadd [#allocation3], %s14
      %s16 = sshll.u32 [#allocation2], 4
      %s17 = int_to_ptr.vmem [resolvable:$true] %s16
      %22 = dma.hbm_to_vmem [thread:$0]  %s0, 256, %s17, [#allocation3], 128, 128, 8
    $region5: #{tpu_custom_call.1} parent=1 // pred_fallthru
      _
    // Predicated region
    $region6: #{tpu_custom_call.1} parent=1 // pred_check
      _
    $region7: #{tpu_custom_call.1} parent=1 // pred_check_branch
      %24 = sbr.rel (0) target = $region9
    $region8: #{tpu_custom_call.1} parent=1 // pred_region
      %s26 = ssub.s32 512, 512
      %27 = vsyncadd [#allocation6], %s26
      %s28 = sshll.u32 [#allocation5], 4
      %s29 = int_to_ptr.vmem [resolvable:$true] %s28
      %34 = dma.hbm_to_vmem [thread:$0]  %s1, 512, %s29, [#allocation6], 64, 64, 4
    $region9: #{tpu_custom_call.1} parent=1 // pred_fallthru
      _
    // Predicated region
    $region10: #{tpu_custom_call.1} parent=1 // pred_check
      _
    $region11: #{tpu_custom_call.1} parent=1 // pred_check_branch
      %36 = sbr.rel (0) target = $region13
    $region12: #{tpu_custom_call.1} parent=1 // pred_region
      _
    $region13: #{tpu_custom_call.1} parent=1 // pred_fallthru
      _
    // Predicated region
    $region14: #{tpu_custom_call.1} parent=1 // pred_check
      _
    $region15: #{tpu_custom_call.1} parent=1 // pred_check_branch
      %38 = sbr.rel (0) target = $region17
    $region16: #{tpu_custom_call.1} parent=1 // pred_region
      %39 = dma.done [#allocation3], 256
    $region17: #{tpu_custom_call.1} parent=1 // pred_fallthru
      _
    // Predicated region
    $region18: #{tpu_custom_call.1} parent=1 // pred_check
      _
    $region19: #{tpu_custom_call.1} parent=1 // pred_check_branch
      %41 = sbr.rel (0) target = $region21
    $region20: #{tpu_custom_call.1} parent=1 // pred_region
      %42 = dma.done [#allocation6], 512
    $region21: #{tpu_custom_call.1} parent=1 // pred_fallthru
      _
    %v44 = vld [vmem:[#allocation2] sm:$0xff]
    %v45 = vld [vmem:[#allocation2 + $0x8] sm:$0xff]
    %v46 = vpack.c.bf16 %v45, %v44
    %v47 = vld [vmem:[#allocation5] sm:$0xf]
    %v48 = vld [vmem:[#allocation5 + $0x4] sm:$0xf]
    %v49 = vld [vmem:[#allocation5 + $0x8] sm:$0xf]
    %v50 = vld [vmem:[#allocation5 + $0xc] sm:$0xf]
    %v51 = vld [vmem:[#allocation5 + $0x10] sm:$0xf]
    %v52 = vld [vmem:[#allocation5 + $0x14] sm:$0xf]
    %v53 = vld [vmem:[#allocation5 + $0x18] sm:$0xf]
    %v54 = vld [vmem:[#allocation5 + $0x1c] sm:$0xf]
    %v55 = vld [vmem:[%s2] sm:$0x1]
    %v57 = vlaneseq
    %v58 = vshrl.u32 %v57, 7
    %v59 = vsub.s32 0, %v58
    %v60 = vrot.slane %v55, %v59
    %v70 = vunpack.c.l.b16 %v47
    %v71 = vunpack.c.l.b16 %v48
    %v72 = vunpack.c.l.b16 %v49
    %v73 = vunpack.c.l.b16 %v50
    %v74 = vunpack.c.l.b16 %v51
    %v75 = vunpack.c.l.b16 %v52
    %v76 = vunpack.c.l.b16 %v53
    %v77 = vunpack.c.l.b16 %v54
    %v78 = vpack.c.b16 %v71, %v70
    %v79 = vpack.c.b16 %v73, %v72
    %v80 = vpack.c.b16 %v75, %v74
    %v81 = vpack.c.b16 %v77, %v76
    %vm86 = vcmask 523264
    %v88 = vsel %vm86, %v46, 0
    %90 = vmatprep.subr.bf16.mxu0 0
    %91 = vmatpush1.bf16.msra.mxu0 %v78
    %92 = vmatprep.subr.bf16.mxu0 0
    %93 = vmatpush1.bf16.msra.mxu0 %v79
    %94 = vmatprep.subr.bf16.mxu0 0
    %95 = vmatpush1.bf16.msra.mxu0 %v80
    %96 = vmatprep.subr.bf16.mxu0 0
    %97 = vmatpush1.bf16.msra.mxu0 %v81
    %98 = vmatprep.subr.bf16.mxu0 0
    %99 = vmatpush1.bf16.msra.mxu0 0
    %100 = vmatprep.subr.bf16.mxu0 0
    %101 = vmatpush1.bf16.msra.mxu0 0
    %102 = vmatprep.subr.bf16.mxu0 0
    %103 = vmatpush1.bf16.msra.mxu0 0
    %104 = vmatprep.subr.bf16.mxu0 0
    %105 = vmatpush1.bf16.msra.mxu0 0
    %106 = vmatprep.subr.bf16.mxu0 0
    %107 = vmatpush1.bf16.msra.mxu0 0
    %108 = vmatprep.subr.bf16.mxu0 0
    %109 = vmatpush1.bf16.msra.mxu0 0
    %110 = vmatprep.subr.bf16.mxu0 0
    %111 = vmatpush1.bf16.msra.mxu0 0
    %112 = vmatprep.subr.bf16.mxu0 0
    %113 = vmatpush1.bf16.msra.mxu0 0
    %114 = vmatprep.subr.bf16.mxu0 0
    %115 = vmatpush1.bf16.msra.mxu0 0
    %116 = vmatprep.subr.bf16.mxu0 0
    %117 = vmatpush1.bf16.msra.mxu0 0
    %118 = vmatprep.subr.bf16.mxu0 0
    %119 = vmatpush1.bf16.msra.mxu0 0
    %120 = vmatprep.subr.bf16.mxu0 0
    %121 = vmatpush1.bf16.msra.mxu0 0
    %122 = vmatprep.mubr.bf16.mxu0 0
    %123 = vmatmul.mubr.bf16.gmra.mrb[0].mxu0 %v88
    %v124 = vpop.f32.mrb[0].mxu0
    %v125 = vadd.f32 %v60, %v124
    %v126 = vpop.f32.mrb[0].mxu0
    %v127 = vpop.f32.mrb[0].mxu0
    %v128 = vadd.f32 %v60, %v127
    %v129 = vpop.f32.mrb[0].mxu0
    %130 = vdwg.mxu0
    %131 = vmax.xlane.f32.xlu0 %v125
    %v132 = vpop.xlane.xlu0 %131
    %133 = vmax.xlane.f32.xlu0 %v128
    %v134 = vpop.xlane.xlu0 %133
    %v135 = vsub.f32 %v125, %v132
    %v136 = vsub.f32 %v128, %v134
    %v137 = vmul.f32 %v135, 1.442695
    %v138 = vpow.pop %v137
    %v139 = vmul.f32 %v136, 1.442695
    %v140 = vpow.pop %v139
    %141 = vadd.xlane.f32.xlu0 %v138
    %v142 = vpop.xlane.xlu0 %141
    %143 = vadd.xlane.f32.xlu0 %v140
    %v144 = vpop.xlane.xlu0 %143
    %v145 = vrcp.pop %v142
    %v146 = vrcp.pop %v144
    %v147 = vmul.f32 %v138, %v145
    %v148 = vmul.f32 %v140, %v146
    %149 = vst [vmem:[#allocation7] sm:$0xff] %v147
    %150 = vst [vmem:[#allocation7 + $0x8] sm:$0xff] %v148
    // Predicated region
    $region22: #{tpu_custom_call.1} parent=1 // pred_check
      _
    $region23: #{tpu_custom_call.1} parent=1 // pred_check_branch
      %152 = sbr.rel (0) target = $region25
    $region24: #{tpu_custom_call.1} parent=1 // pred_region
      %s154 = ssub.s32 256, 256
      %155 = vsyncadd [#allocation4], %s154
      %s156 = sshll.u32 [#allocation7], 4
      %s157 = int_to_ptr.vmem [resolvable:$true] %s156
      %162 = dma.vmem_to_hbm [thread:$0]  %s157, 256, %s3, [#allocation4], 128, 128, 8
    $region25: #{tpu_custom_call.1} parent=1 // pred_fallthru
      _
    // Predicated region
    $region26: #{tpu_custom_call.1} parent=1 // pred_check
      _
    $region27: #{tpu_custom_call.1} parent=1 // pred_check_branch
      %164 = sbr.rel (0) target = $region29
    $region28: #{tpu_custom_call.1} parent=1 // pred_region
      %165 = dma.done [#allocation4], 256
    $region29: #{tpu_custom_call.1} parent=1 // pred_fallthru
      _
    %166 = vsyncpa [#allocation3], 1
    %167 = vsyncpa [#allocation6], 1
    %168 = vsyncpa [#allocation4], 1

</llo_original>
